<compile_context>
chip_gen: v6e
topology: v6e:2x2x1
jax: 0.10.0
libtpu: 0.0.40
codegen_flags: <defaults>
</compile_context>

<pallas_src>
import functools
import math

import jax
import jax.numpy as jnp
from jax import lax
from jax.experimental import pallas as pl
from jax.experimental.pallas import tpu as pltpu

VMEM = pltpu.MemorySpace.VMEM
_VMEM_LIMIT = 32 * 1024 * 1024  # deliberate scoped-VMEM budget; safe on v5e/v6e/v7x


def _pick_tile(dim, target, align):
    """Largest tile <= target that is a multiple of `align` and evenly divides
    `dim`; falls back to the full dim (always a legal BlockSpec block)."""
    if dim <= target:
        return dim
    t = (target // align) * align
    while t >= align:
        if dim % t == 0:
            return t
        t -= align
    return dim


# --------------------------- tiled matmul (+bias, +gelu) ---------------------

def _matmul_bias_kernel(x_ref, w_ref, b_ref, o_ref, acc_ref, *, activation):
    k = pl.program_id(2)

    @pl.when(k == 0)
    def _():
        acc_ref[...] = jnp.zeros_like(acc_ref)

    acc_ref[...] += jnp.dot(
        x_ref[...].astype(jnp.bfloat16), w_ref[...],
        preferred_element_type=jnp.float32)

    @pl.when(k == pl.num_programs(2) - 1)
    def _():
        h = acc_ref[...] + b_ref[...]
        if activation == "gelu":
            # TODO(synk): canonical BERT uses erf-GELU; tanh approximation kept
            # for guaranteed Mosaic lowering (matches previous working version).
            h = jax.nn.gelu(h, approximate=True)
        o_ref[...] = h.astype(o_ref.dtype)


def matmul_bias(x, w, b, activation=None):
    """y = act(x @ w + b); x f32 (M,K), w bf16 (K,N), b f32 (N,) -> f32 (M,N)."""
    M, K = x.shape
    N = w.shape[1]
    tm = _pick_tile(M, 256, 8)
    tn = _pick_tile(N, 512, 128)
    tk = _pick_tile(K, 512, 128)
    grid = (M // tm, N // tn, K // tk)
    cost = pl.CostEstimate(
        flops=2 * M * N * K,
        transcendentals=(M * N if activation == "gelu" else 0),
        bytes_accessed=M * K * 4 + K * N * 2 + M * N * 4 + N * 4)
    return pl.pallas_call(
        functools.partial(_matmul_bias_kernel, activation=activation),
        out_shape=jax.ShapeDtypeStruct((M, N), jnp.float32),
        grid_spec=pltpu.PrefetchScalarGridSpec(
            num_scalar_prefetch=0,
            grid=grid,
            in_specs=[
                pl.BlockSpec((tm, tk), lambda i, j, k: (i, k)),
                pl.BlockSpec((tk, tn), lambda i, j, k: (k, j)),
                pl.BlockSpec((1, tn), lambda i, j, k: (0, j)),
            ],
            out_specs=pl.BlockSpec((tm, tn), lambda i, j, k: (i, j)),
            scratch_shapes=[pltpu.VMEM((tm, tn), jnp.float32)]),
        compiler_params=pltpu.CompilerParams(
            dimension_semantics=("parallel", "parallel", "arbitrary"),
            vmem_limit_bytes=_VMEM_LIMIT),
        cost_estimate=cost,
    )(x, w, b.reshape(1, N))


# ------------------ tiled matmul + bias + residual + LayerNorm ---------------

def _matmul_bias_res_ln_kernel(x_ref, w_ref, b_ref, r_ref, g_ref, bb_ref,
                               o_ref, acc_ref, *, eps):
    k = pl.program_id(1)

    @pl.when(k == 0)
    def _():
        acc_ref[...] = jnp.zeros_like(acc_ref)

    acc_ref[...] += jnp.dot(
        x_ref[...].astype(jnp.bfloat16), w_ref[...],
        preferred_element_type=jnp.float32)

    @pl.when(k == pl.num_programs(1) - 1)
    def _():
        h = acc_ref[...] + b_ref[...] + r_ref[...]
        mu = jnp.mean(h, axis=-1, keepdims=True)
        var = jnp.mean((h - mu) ** 2, axis=-1, keepdims=True)
        o_ref[...] = ((h - mu) * lax.rsqrt(var + eps)
                      * g_ref[...] + bb_ref[...]).astype(o_ref.dtype)


def matmul_bias_residual_ln(x, w, b, res, gamma, beta, *, eps=1e-12):
    """y = LayerNorm(x @ w + b + res); output hidden dim kept fully resident."""
    M, K = x.shape
    N = w.shape[1]
    tm = _pick_tile(M, 256, 8)
    tk = _pick_tile(K, 512, 128)
    grid = (M // tm, K // tk)
    cost = pl.CostEstimate(
        flops=2 * M * N * K + 8 * M * N,
        transcendentals=M,
        bytes_accessed=M * K * 4 + K * N * 2 + 2 * M * N * 4 + 3 * N * 4)
    return pl.pallas_call(
        functools.partial(_matmul_bias_res_ln_kernel, eps=eps),
        out_shape=jax.ShapeDtypeStruct((M, N), jnp.float32),
        grid_spec=pltpu.PrefetchScalarGridSpec(
            num_scalar_prefetch=0,
            grid=grid,
            in_specs=[
                pl.BlockSpec((tm, tk), lambda i, k: (i, k)),
                pl.BlockSpec((tk, N), lambda i, k: (k, 0)),
                pl.BlockSpec((1, N), lambda i, k: (0, 0)),
                pl.BlockSpec((tm, N), lambda i, k: (i, 0)),
                pl.BlockSpec((1, N), lambda i, k: (0, 0)),
                pl.BlockSpec((1, N), lambda i, k: (0, 0)),
            ],
            out_specs=pl.BlockSpec((tm, N), lambda i, k: (i, 0)),
            scratch_shapes=[pltpu.VMEM((tm, N), jnp.float32)]),
        compiler_params=pltpu.CompilerParams(
            dimension_semantics=("parallel", "arbitrary"),
            vmem_limit_bytes=_VMEM_LIMIT),
        cost_estimate=cost,
    )(x, w, b.reshape(1, N), res, gamma.reshape(1, N), beta.reshape(1, N))


# --------------------------- row-tiled LayerNorm -----------------------------

def _layernorm_kernel(x_ref, g_ref, b_ref, o_ref, *, eps):
    x = x_ref[...]
    mu = jnp.mean(x, axis=-1, keepdims=True)
    var = jnp.mean((x - mu) ** 2, axis=-1, keepdims=True)
    o_ref[...] = (x - mu) * lax.rsqrt(var + eps) * g_ref[...] + b_ref[...]


def layernorm(x, gamma, beta, *, eps=1e-12):
    M, H = x.shape
    tm = _pick_tile(M, 512, 8)
    grid = (M // tm,)
    return pl.pallas_call(
        functools.partial(_layernorm_kernel, eps=eps),
        out_shape=jax.ShapeDtypeStruct((M, H), jnp.float32),
        grid_spec=pltpu.PrefetchScalarGridSpec(
            num_scalar_prefetch=0,
            grid=grid,
            in_specs=[
                pl.BlockSpec((tm, H), lambda i: (i, 0)),
                pl.BlockSpec((1, H), lambda i: (0, 0)),
                pl.BlockSpec((1, H), lambda i: (0, 0)),
            ],
            out_specs=pl.BlockSpec((tm, H), lambda i: (i, 0))),
        compiler_params=pltpu.CompilerParams(
            dimension_semantics=("parallel",),
            vmem_limit_bytes=_VMEM_LIMIT),
    )(x, gamma.reshape(1, H), beta.reshape(1, H))


# --------------------------- flash attention ---------------------------------

def _flash_attn_kernel(q_ref, k_ref, v_ref, mb_ref, o_ref,
                       m_sc, l_sc, acc_sc, *, scale):
    ki = pl.program_id(3)

    @pl.when(ki == 0)
    def _():
        m_sc[...] = jnp.full_like(m_sc, -1e30)
        l_sc[...] = jnp.zeros_like(l_sc)
        acc_sc[...] = jnp.zeros_like(acc_sc)

    q = q_ref[0, 0]            # (tq, D)
    k = k_ref[0, 0]            # (tk, D)
    v = v_ref[0, 0]            # (tk, D)
    s = jnp.dot(q.astype(jnp.bfloat16), k.astype(jnp.bfloat16).T,
                preferred_element_type=jnp.float32) * scale      # (tq, tk)
    s = s + mb_ref[0]                                            # additive mask

    m_new = jnp.maximum(m_sc[...], jnp.max(s, axis=-1, keepdims=True))
    alpha = jnp.exp(m_sc[...] - m_new)
    p = jnp.exp(s - m_new)
    l_sc[...] = alpha * l_sc[...] + jnp.sum(p, axis=-1, keepdims=True)
    acc_sc[...] = alpha * acc_sc[...] + jnp.dot(
        p.astype(jnp.bfloat16), v.astype(jnp.bfloat16),
        preferred_element_type=jnp.float32)
    m_sc[...] = m_new

    @pl.when(ki == pl.num_programs(3) - 1)
    def _():
        o_ref[0, 0] = (acc_sc[...]
                       * pl.reciprocal(l_sc[...], approx=True)).astype(o_ref.dtype)


def flash_attention(q, k, v, mask_bias):
    """q,k,v: (B, H, S, D) f32; mask_bias: (B, 1, S) f32 additive (-1e9 on pad)."""
    B, H, S, D = q.shape
    tq = _pick_tile(S, 256, 8)
    tk = _pick_tile(S, 512, 128)
    grid = (B, H, S // tq, S // tk)
    cost = pl.CostEstimate(
        flops=4 * B * H * S * S * D,
        transcendentals=B * H * S * S,
        bytes_accessed=4 * B * H * S * D * 4 + B * S * 4)
    kern = functools.partial(_flash_attn_kernel, scale=1.0 / math.sqrt(D))
    return pl.pallas_call(
        kern,
        out_shape=jax.ShapeDtypeStruct((B, H, S, D), jnp.float32),
        grid_spec=pltpu.PrefetchScalarGridSpec(
            num_scalar_prefetch=0,
            grid=grid,
            in_specs=[
                pl.BlockSpec((1, 1, tq, D), lambda b, h, qi, ki: (b, h, qi, 0)),
                pl.BlockSpec((1, 1, tk, D), lambda b, h, qi, ki: (b, h, ki, 0)),
                pl.BlockSpec((1, 1, tk, D), lambda b, h, qi, ki: (b, h, ki, 0)),
                pl.BlockSpec((1, 1, tk), lambda b, h, qi, ki: (b, 0, ki)),
            ],
            out_specs=pl.BlockSpec((1, 1, tq, D),
                                   lambda b, h, qi, ki: (b, h, qi, 0)),
            scratch_shapes=[
                pltpu.VMEM((tq, 1), jnp.float32),
                pltpu.VMEM((tq, 1), jnp.float32),
                pltpu.VMEM((tq, D), jnp.float32),
            ]),
        compiler_params=pltpu.CompilerParams(
            dimension_semantics=("parallel", "parallel", "parallel", "arbitrary"),
            vmem_limit_bytes=_VMEM_LIMIT),
        cost_estimate=cost,
    )(q, k, v, mask_bias)


# --------------------------- final bilinear score ----------------------------

def _score_kernel(c_ref, r_ref, m_ref, o_ref):
    # contexts.mm(M); bmm((B,1,H),(B,H,1)) == row-wise dot; sigmoid.
    cm = jnp.dot(c_ref[...], m_ref[...], preferred_element_type=jnp.float32)
    s = jnp.sum(cm * r_ref[...], axis=-1, keepdims=True)
    o_ref[...] = jax.nn.sigmoid(s)


def score(contexts_first, responses_first, M):
    B = contexts_first.shape[0]
    return pl.pallas_call(
        _score_kernel,
        out_shape=jax.ShapeDtypeStruct((B, 1), jnp.float32),
        in_specs=[pl.BlockSpec(memory_space=VMEM)] * 3,
        out_specs=pl.BlockSpec(memory_space=VMEM),
    )(contexts_first, responses_first, M)


# --------------------------- BERT encoder (glue + kernels) -------------------

def init_params(key, *, vocab, max_pos, hidden, heads, layers, inter):
    keys = iter(jax.random.split(key, 8 + 16 * layers))
    std = 0.02

    def nrm(shape, scale=std):
        return jax.random.normal(next(keys), shape, jnp.float32) * scale

    params = {
        "word_emb": nrm((vocab, hidden)),
        "pos_emb": nrm((max_pos, hidden)),
        "emb_ln_g": jnp.ones((hidden,), jnp.float32),
        "emb_ln_b": jnp.zeros((hidden,), jnp.float32),
        "layers": [],
    }
    for _ in range(layers):
        wq, wk, wv = (nrm((hidden, hidden)), nrm((hidden, hidden)),
                      nrm((hidden, hidden)))
        lyr = {
            # fused Q|K|V projection weights, stored bf16 for the MXU
            "wqkv": jnp.concatenate([wq, wk, wv], axis=1).astype(jnp.bfloat16),
            "bqkv": jnp.zeros((3 * hidden,), jnp.float32),
            "wo": nrm((hidden, hidden)).astype(jnp.bfloat16),
            "bo": jnp.zeros((hidden,), jnp.float32),
            "ln1_g": jnp.ones((hidden,), jnp.float32),
            "ln1_b": jnp.zeros((hidden,), jnp.float32),
            "wi": nrm((hidden, inter)).astype(jnp.bfloat16),
            "bi": jnp.zeros((inter,), jnp.float32),
            "wo2": nrm((inter, hidden)).astype(jnp.bfloat16),
            "bo2": jnp.zeros((hidden,), jnp.float32),
            "ln2_g": jnp.ones((hidden,), jnp.float32),
            "ln2_b": jnp.zeros((hidden,), jnp.float32),
        }
        params["layers"].append(lyr)
    # xavier_normal_(M): std = sqrt(2 / (fan_in + fan_out))
    params["M"] = jax.random.normal(
        next(keys), (hidden, hidden), jnp.float32
    ) * math.sqrt(2.0 / (hidden + hidden))
    return params


def bert_encode(params, ids, mask, *, heads):
    """Returns first-token ([CLS]) representation, shape (B, hidden)."""
    B, S = ids.shape
    H = params["word_emb"].shape[1]
    hd = H // heads

    # Embedding gathers / head split-merge stay plain-JAX glue.
    x = params["word_emb"][ids] + params["pos_emb"][:S][None, :, :]
    x2 = x.reshape(B * S, H).astype(jnp.float32)
    x2 = layernorm(x2, params["emb_ln_g"], params["emb_ln_b"])

    # Precompute additive key mask once (B, 1, S).
    mask_bias = ((1.0 - mask) * (-1e9)).astype(jnp.float32)[:, None, :]

    for lyr in params["layers"]:
        qkv = matmul_bias(x2, lyr["wqkv"], lyr["bqkv"])          # (B*S, 3H)
        qkv = qkv.reshape(B, S, 3, heads, hd).transpose(2, 0, 3, 1, 4)
        q, k, v = qkv[0], qkv[1], qkv[2]                         # (B, heads, S, hd)

        ctx = flash_attention(q, k, v, mask_bias)                # (B, heads, S, hd)
        # TODO(synk): head split/merge transposes remain plain-JAX layout glue.
        ctx = ctx.transpose(0, 2, 1, 3).reshape(B * S, H)

        # attn out-proj + bias + residual + LayerNorm fused
        x2 = matmul_bias_residual_ln(ctx, lyr["wo"], lyr["bo"], x2,
                                     lyr["ln1_g"], lyr["ln1_b"])

        ff = matmul_bias(x2, lyr["wi"], lyr["bi"], activation="gelu")
        # FFN down-proj + bias + residual + LayerNorm fused
        x2 = matmul_bias_residual_ln(ff, lyr["wo2"], lyr["bo2"], x2,
                                     lyr["ln2_g"], lyr["ln2_b"])

    return x2.reshape(B, S, H)[:, 0, :]


def text_bert_encoder_forward(params, contexts, cm, responses, rm, *, heads):
    contexts_first = bert_encode(params, contexts, cm, heads=heads)
    responses_first = bert_encode(params, responses, rm, heads=heads)
    # contexts.mm(M); view(-1,1,H) bmm view(-1,H,1); sigmoid -> (B, 1)
    return score(contexts_first, responses_first, params["M"])


# --------------------------- main --------------------------------------------

if __name__ == "__main__":
    B, S = 2, 8
    HIDDEN, HEADS, LAYERS, INTER = 32, 4, 2, 64
    VOCAB, MAX_POS = 50, 16

    key = jax.random.PRNGKey(0)
    k_ctx, k_rsp, k_par = jax.random.split(key, 3)

    contexts = jax.random.randint(k_ctx, (B, S), 0, VOCAB, dtype=jnp.int32)
    responses = jax.random.randint(k_rsp, (B, S), 0, VOCAB, dtype=jnp.int32)
    # attention masks: second example has padded positions at the end
    cm = jnp.ones((B, S), jnp.float32).at[1, S - 2:].set(0.0)
    rm = jnp.ones((B, S), jnp.float32).at[1, S - 1:].set(0.0)

    params = init_params(
        k_par, vocab=VOCAB, max_pos=MAX_POS, hidden=HIDDEN,
        heads=HEADS, layers=LAYERS, inter=INTER,
    )

    probs = text_bert_encoder_forward(params, contexts, cm, responses, rm,
                                      heads=HEADS)
    probs = jax.block_until_ready(probs)

    assert probs.shape == (B, 1), probs.shape
    assert probs.dtype == jnp.float32
    assert bool(jnp.all(jnp.isfinite(probs)))
    assert bool(jnp.all((probs > 0.0) & (probs < 1.0)))
    print("KERNEL_OK")
</pallas_src>

<mosaic_0001>
module attributes {stable_mosaic.version = 11 : i64} {
  func.func @_layernorm_kernel(%arg0: i32, %arg1: memref<16x32xf32, #tpu.memory_space<vmem>>, %arg2: memref<1x32xf32, #tpu.memory_space<vmem>>, %arg3: memref<1x32xf32, #tpu.memory_space<vmem>>, %arg4: memref<16x32xf32, #tpu.memory_space<vmem>>) attributes {dimension_semantics = [#tpu.dimension_semantics<parallel>], iteration_bounds = array<i64: 1>, scalar_prefetch = 0 : i64, scratch_operands = 0 : i64, tpu.core_type = #tpu.core_type<tc>, window_params = [{transform_indices = @transform_0, window_bounds = array<i64: 16, 32>}, {pipeline_mode = #tpu.pipeline_mode<synchronous>, transform_indices = @transform_1, window_bounds = array<i64: 1, 32>}, {pipeline_mode = #tpu.pipeline_mode<synchronous>, transform_indices = @transform_2, window_bounds = array<i64: 1, 32>}, {transform_indices = @transform_3, window_bounds = array<i64: 16, 32>}]} {
    %c0 = arith.constant 0 : index
    %c0_0 = arith.constant 0 : index
    %0 = vector.load %arg1[%c0, %c0_0] : memref<16x32xf32, #tpu.memory_space<vmem>>, vector<16x32xf32>
    %cst = arith.constant dense<0.000000e+00> : vector<16xf32>
    %1 = vector.multi_reduction <add>, %0, %cst [1] : vector<16x32xf32> to vector<16xf32>
    %2 = vector.shape_cast %1 : vector<16xf32> to vector<16x1xf32>
    %cst_1 = arith.constant 3.200000e+01 : f32
    %3 = vector.broadcast %cst_1 : f32 to vector<16x1xf32>
    %4 = arith.divf %2, %3 : vector<16x1xf32>
    %5 = vector.broadcast %4 : vector<16x1xf32> to vector<16x32xf32>
    %6 = arith.subf %0, %5 : vector<16x32xf32>
    %7 = arith.mulf %6, %6 : vector<16x32xf32>
    %cst_2 = arith.constant dense<0.000000e+00> : vector<16xf32>
    %8 = vector.multi_reduction <add>, %7, %cst_2 [1] : vector<16x32xf32> to vector<16xf32>
    %9 = vector.shape_cast %8 : vector<16xf32> to vector<16x1xf32>
    %cst_3 = arith.constant 3.200000e+01 : f32
    %10 = vector.broadcast %cst_3 : f32 to vector<16x1xf32>
    %11 = arith.divf %9, %10 : vector<16x1xf32>
    %12 = vector.broadcast %4 : vector<16x1xf32> to vector<16x32xf32>
    %13 = arith.subf %0, %12 : vector<16x32xf32>
    %cst_4 = arith.constant 9.99999996E-13 : f32
    %14 = vector.broadcast %cst_4 : f32 to vector<16x1xf32>
    %15 = arith.addf %11, %14 : vector<16x1xf32>
    %16 = math.rsqrt %15 : vector<16x1xf32>
    %17 = vector.broadcast %16 : vector<16x1xf32> to vector<16x32xf32>
    %18 = arith.mulf %13, %17 : vector<16x32xf32>
    %c0_5 = arith.constant 0 : index
    %c0_6 = arith.constant 0 : index
    %19 = vector.load %arg2[%c0_5, %c0_6] : memref<1x32xf32, #tpu.memory_space<vmem>>, vector<1x32xf32>
    %20 = vector.broadcast %19 : vector<1x32xf32> to vector<16x32xf32>
    %21 = arith.mulf %18, %20 : vector<16x32xf32>
    %c0_7 = arith.constant 0 : index
    %c0_8 = arith.constant 0 : index
    %22 = vector.load %arg3[%c0_7, %c0_8] : memref<1x32xf32, #tpu.memory_space<vmem>>, vector<1x32xf32>
    %23 = vector.broadcast %22 : vector<1x32xf32> to vector<16x32xf32>
    %24 = arith.addf %21, %23 : vector<16x32xf32>
    %c0_9 = arith.constant 0 : index
    %c0_10 = arith.constant 0 : index
    %25 = vector.load %arg4[%c0_9, %c0_10] : memref<16x32xf32, #tpu.memory_space<vmem>>, vector<16x32xf32>
    tpu.vector_store %arg4[%c0_9, %c0_10], %24 {strides = array<i32>} : memref<16x32xf32, #tpu.memory_space<vmem>>, vector<16x32xf32>,
    return
  }
  func.func @transform_0(%arg0: i32) -> (i32, i32) {
    %c0_i32 = arith.constant 0 : i32
    %c0_i32_0 = arith.constant 0 : i32
    return %arg0, %c0_i32 : i32, i32
  }
  func.func @transform_1(%arg0: i32) -> (i32, i32) {
    %c0_i32 = arith.constant 0 : i32
    %c0_i32_0 = arith.constant 0 : i32
    %c0_i32_1 = arith.constant 0 : i32
    return %c0_i32, %c0_i32_0 : i32, i32
  }
  func.func @transform_2(%arg0: i32) -> (i32, i32) {
    %c0_i32 = arith.constant 0 : i32
    %c0_i32_0 = arith.constant 0 : i32
    %c0_i32_1 = arith.constant 0 : i32
    return %c0_i32, %c0_i32_0 : i32, i32
  }
  func.func @transform_3(%arg0: i32) -> (i32, i32) {
    %c0_i32 = arith.constant 0 : i32
    %c0_i32_0 = arith.constant 0 : i32
    return %arg0, %c0_i32 : i32, i32
  }
}

</mosaic_0001>

<llo_original>
// kernel: tpu_custom_call.1
$region0: #{tpu_custom_call.1}
  #allocation0 [shape = 'u32[]', space=smem, size = 0x4, offset = 0x4, fixed_abs, tag = 'smem constant byte address 0x4 - core index']
  #allocation1 [shape = 'u32[144,128]{1,0:T(1,128)}', space=vmem, size = 0x12000, scoped, tag = 'internal scratch']
  %s0 = inlined_call_operand.hbm [shape: f32[16,32], index: 0, kind: input, shape index: {}]
  %s1 = inlined_call_operand.vmem [shape: f32[1,32], index: 1, kind: input, shape index: {}]
  %s2 = inlined_call_operand.vmem [shape: f32[1,32], index: 2, kind: input, shape index: {}]
  %s3 = inlined_call_operand.hbm [shape: f32[16,32], index: 3, kind: output, shape index: {}]
  %s4 = sld [smem:[#allocation0]]
  $region26: #{tpu_custom_call.1} parent=0
    _
  %s6 = ssub.s32 1, %s4
  %s7 = scalar_select 0, %s6, %s4
  $region1: #{tpu_custom_call.1} parent=0
    #allocation2 [shape = 'u8[8192]{0}', space=vmem, size = 0x2000, scoped, tag = 'input window, operand 0, single buffered']
    #allocation3 [shape = 's32[1]{0}', space=sflag, size = 0x4, scoped, tag = 'scoped memory for tpu_custom_call.1']
    #allocation4 [shape = 's32[1]{0}', space=sflag, size = 0x4, scoped, tag = 'scoped memory for tpu_custom_call.1']
    #allocation5 [shape = 'u8[8192]{0}', space=vmem, size = 0x2000, scoped, tag = 'output window, operand 0, single buffered']
    %8 = vsyncpa [#allocation3], 0
    %9 = vsyncpa [#allocation4], 0
    // Predicated region
    $region2: #{tpu_custom_call.1} parent=1 // pred_check
      _
    $region3: #{tpu_custom_call.1} parent=1 // pred_check_branch
      %11 = sbr.rel (0) target = $region5
    $region4: #{tpu_custom_call.1} parent=1 // pred_region
      %s13 = ssub.s32 256, 256
      %14 = vsyncadd [#allocation3], %s13
      %s15 = sshll.u32 [#allocation2], 4
      %s16 = int_to_ptr.vmem [resolvable:$true] %s15
      %21 = dma.hbm_to_vmem [thread:$0]  %s0, 256, %s16, [#allocation3], 128, 128, 8
    $region5: #{tpu_custom_call.1} parent=1 // pred_fallthru
      _
    // Predicated region
    $region6: #{tpu_custom_call.1} parent=1 // pred_check
      _
    $region7: #{tpu_custom_call.1} parent=1 // pred_check_branch
      %23 = sbr.rel (0) target = $region9
    $region8: #{tpu_custom_call.1} parent=1 // pred_region
      _
    $region9: #{tpu_custom_call.1} parent=1 // pred_fallthru
      _
    // Predicated region
    $region10: #{tpu_custom_call.1} parent=1 // pred_check
      _
    $region11: #{tpu_custom_call.1} parent=1 // pred_check_branch
      %25 = sbr.rel (0) target = $region13
    $region12: #{tpu_custom_call.1} parent=1 // pred_region
      _
    $region13: #{tpu_custom_call.1} parent=1 // pred_fallthru
      _
    // Predicated region
    $region14: #{tpu_custom_call.1} parent=1 // pred_check
      _
    $region15: #{tpu_custom_call.1} parent=1 // pred_check_branch
      %27 = sbr.rel (0) target = $region17
    $region16: #{tpu_custom_call.1} parent=1 // pred_region
      %28 = dma.done [#allocation3], 256
    $region17: #{tpu_custom_call.1} parent=1 // pred_fallthru
      _
    %v29 = vld [vmem:[#allocation2] sm:$0xff]
    %v30 = vld [vmem:[#allocation2 + $0x8] sm:$0xff]
    %vm31 = vcmask 261120
    %v32 = vsel %vm31, %v29, 0.0
    %33 = vadd.xlane.f32.xlu0 %v32
    %v34 = vpop.xlane.xlu0 %33
    %v35 = vsel %vm31, %v30, 0.0
    %36 = vadd.xlane.f32.xlu0 %v35
    %v37 = vpop.xlane.xlu0 %36
    %v38 = vrcp.pop 32.0
    %v39 = vmul.f32 %v34, %v38
    %v40 = vmul.f32 %v37, %v38
    %v41 = vsub.f32 %v29, %v39
    %v42 = vsub.f32 %v30, %v40
    %v43 = vmul.f32 %v41, %v41
    %v44 = vmul.f32 %v42, %v42
    %v45 = vsel %vm31, %v43, 0.0
    %46 = vadd.xlane.f32.xlu0 %v45
    %v47 = vpop.xlane.xlu0 %46
    %v48 = vsel %vm31, %v44, 0.0
    %49 = vadd.xlane.f32.xlu0 %v48
    %v50 = vpop.xlane.xlu0 %49
    %v51 = vmul.f32 %v47, %v38
    %v52 = vmul.f32 %v50, %v38
    %v53 = vadd.f32 %v51, 1e-12
    %v54 = vadd.f32 %v52, 1e-12
    %v55 = vrsqrt.pop %v53
    %v56 = vrsqrt.pop %v54
    %v57 = vmul.f32 %v41, %v55
    %v58 = vmul.f32 %v42, %v56
    %v59 = vld [vmem:[%s1] sm:$0x1]
    %v61 = vlaneseq
    %v62 = vshrl.u32 %v61, 7
    %v63 = vsub.s32 0, %v62
    %v64 = vrot.slane %v59, %v63
    %v66 = vmul.f32 %v57, %v64
    %v67 = vmul.f32 %v58, %v64
    %v68 = vld [vmem:[%s2] sm:$0x1]
    %v70 = vlaneseq
    %v71 = vshrl.u32 %v70, 7
    %v72 = vsub.s32 0, %v71
    %v73 = vrot.slane %v68, %v72
    %v75 = vadd.f32 %v66, %v73
    %v76 = vadd.f32 %v67, %v73
    %77 = vst.msk [vmem:[#allocation5] sm:$0xff] %vm31, %v75
    %78 = vst.msk [vmem:[#allocation5 + $0x8] sm:$0xff] %vm31, %v76
    // Predicated region
    $region18: #{tpu_custom_call.1} parent=1 // pred_check
      _
    $region19: #{tpu_custom_call.1} parent=1 // pred_check_branch
      %80 = sbr.rel (0) target = $region21
    $region20: #{tpu_custom_call.1} parent=1 // pred_region
      %s82 = ssub.s32 256, 256
      %83 = vsyncadd [#allocation4], %s82
      %s84 = sshll.u32 [#allocation5], 4
      %s85 = int_to_ptr.vmem [resolvable:$true] %s84
      %90 = dma.vmem_to_hbm [thread:$0]  %s85, 256, %s3, [#allocation4], 128, 128, 8
    $region21: #{tpu_custom_call.1} parent=1 // pred_fallthru
      _
    // Predicated region
    $region22: #{tpu_custom_call.1} parent=1 // pred_check
      _
    $region23: #{tpu_custom_call.1} parent=1 // pred_check_branch
      %92 = sbr.rel (0) target = $region25
    $region24: #{tpu_custom_call.1} parent=1 // pred_region
      %93 = dma.done [#allocation4], 256
    $region25: #{tpu_custom_call.1} parent=1 // pred_fallthru
      _
    %94 = vsyncpa [#allocation3], 1
    %95 = vsyncpa [#allocation4], 1

</llo_original>
